<compile_context>
chip_gen: v7x
topology: tpu7x:2x2x1
jax: 0.10.0
libtpu: 0.0.40
codegen_flags: <defaults>
</compile_context>

<pallas_src>
import jax
import jax.numpy as jnp
from jax.experimental import pallas as pl
from jax.experimental.pallas import tpu as pltpu

STUDENT_TEMP = 0.1
TEACHER_TEMP = 0.04       # teacher_temp_schedule[epoch=0] (warmup epochs = 0)
PRIOR_MOMENTUM = 0.9
NUM_SPLITS = 2            # leading "parallel" axis -> sharded across TCs on v7x


def _round_up(x, m):
    return ((x + m - 1) // m) * m


def _vmem_budget_bytes():
    """Scoped-VMEM budget per chip generation."""
    cap = 128 * 1024 * 1024
    try:
        cap = int(pltpu.get_tpu_info().vmem_capacity_bytes)
    except Exception:
        pass
    if cap <= 64 * 1024 * 1024:          # v7x: 64 MiB physical per TC
        return 48 * 1024 * 1024
    return min(96 * 1024 * 1024, (cap * 3) // 4)   # v5e / v6e: 128 MiB physical


def _make_kernel(b_total, block_b, tiles_per_split, needs_mask):
    """Builds the kernel with static batch/tile constants closed over."""
    inv_teacher_temp = 1.0 / TEACHER_TEMP
    inv_student_temp = 1.0 / STUDENT_TEMP

    def kernel(teacher_ref, student_ref, prior_ref,          # inputs
               loss_part_ref, bp_part_ref,                   # outputs (per-split partials)
               logprior_ref, lossvec_ref):                   # scratch
        c = pl.program_id(0)          # split index (parallel across cores if >1)
        j = pl.program_id(1)          # batch tile within the split (reduction axis)
        last = pl.num_programs(1) - 1

        @pl.when(j == 0)
        def _init():
            # Hoisted log(prior) + accumulator init (per split).
            logprior_ref[...] = jnp.log(prior_ref[...])
            bp_part_ref[...] = jnp.zeros_like(bp_part_ref)
            lossvec_ref[...] = jnp.zeros_like(lossvec_ref)

        # Load tile in native dtype, upcast to f32 for compute.
        t = teacher_ref[...].astype(jnp.float32)                          # [bt, D]
        s = student_ref[...].astype(jnp.float32)                          # [bt, D]

        if needs_mask:
            # Mask the LOADED rows before any exp: the unspecified contents of a
            # partial trailing block must never reach exp/reciprocal.
            tile = c * tiles_per_split + j
            rows = tile * block_b + jax.lax.broadcasted_iota(
                jnp.int32, (block_b, 1), 0)
            valid = rows < b_total                                        # bool [bt,1]
            validf = valid.astype(jnp.float32)
            t = jnp.where(valid, t, 0.0)
            s = jnp.where(valid, s, 0.0)
        else:
            validf = None

        t = t * inv_teacher_temp
        s = s * inv_student_temp

        # Teacher softmax pieces (stable); normalized p is never materialized.
        m_t = jnp.max(t, axis=-1, keepdims=True)                          # [bt, 1]
        e_t = jnp.exp(t - m_t)                                            # [bt, D]
        inv_z = pl.reciprocal(jnp.sum(e_t, axis=-1, keepdims=True),
                              approx=False)                               # [bt, 1]
        w = inv_z if validf is None else inv_z * validf

        # loss_1 = -sum(p * s, -1) = -(sum(e_t * s, -1) * inv_Z)
        loss1 = -(jnp.sum(e_t * s, axis=-1, keepdims=True) * inv_z)       # [bt, 1]

        # batch_prior partial: column sums of p over this tile (masked rows -> 0).
        bp_part_ref[...] += jnp.sum(e_t * w, axis=0, keepdims=True)[None]  # [1,1,D]

        # loss_2 = logsumexp(s + log(prior), -1)
        z = s + logprior_ref[...]                                         # [bt, D]
        m_z = jnp.max(z, axis=-1, keepdims=True)
        loss2 = jnp.log(jnp.sum(jnp.exp(z - m_z), axis=-1, keepdims=True)) + m_z

        per_row = loss1 + loss2
        if validf is not None:
            per_row = per_row * validf
        lossvec_ref[...] += per_row        # vector accumulator: no per-step scalar reduce

        @pl.when(j == last)
        def _finalize():
            loss_part_ref[...] = jnp.full(
                loss_part_ref.shape, jnp.sum(lossvec_ref[...]), jnp.float32)

    return kernel


def protocpc_loss(teacher_output, student_output, prior, *, block_b=None,
                  num_splits=NUM_SPLITS):
    """Returns (scalar loss, updated prior [1, D])."""
    B, D = teacher_output.shape
    assert student_output.shape == (B, D)
    prior = prior.astype(jnp.float32).reshape(1, D)

    t_item = jnp.dtype(teacher_output.dtype).itemsize
    s_item = jnp.dtype(student_output.dtype).itemsize
    in_item = max(t_item, s_item)

    budget = _vmem_budget_bytes()
    # Footprint per batch row: 2 inputs x 2 DMA buffers + ~5 live f32 [bt, D] slabs.
    per_row = D * (4 * in_item + 5 * 4)
    resident = 10 * D * 4                       # prior / log-prior / bp blocks + headroom
    bt_vmem = max(8, ((max(budget - resident, per_row * 8)) // per_row) // 8 * 8)

    if block_b is None:
        # Amortize per-grid-step overhead: >=128 rows or >=2 MiB per input tile.
        bt_target = _round_up(max(128, (2 * 1024 * 1024) // max(D * in_item, 1)), 8)
        bt_cap = max(8, (B // 8) * 8) if B >= 8 else 8
        block_b = min(bt_vmem, bt_target, bt_cap)
    else:
        # Shrink an explicit request to fit the VMEM budget rather than setting a
        # scoped limit below the real footprint.
        block_b = min(max(8, (int(block_b) // 8) * 8), bt_vmem)
    block_b = int(max(8, block_b))

    total_tiles = (B + block_b - 1) // block_b
    num_splits = int(max(1, min(num_splits, total_tiles)))
    tpc = (total_tiles + num_splits - 1) // num_splits     # tiles per split
    needs_mask = (num_splits * tpc * block_b != B)

    last_tile = total_tiles - 1
    if num_splits * tpc == total_tiles:
        tile_map = lambda c, j: (c * tpc + j, 0)
    else:
        # Last split may own fewer real tiles; clamp the block index (the duplicated
        # tile's rows are fully masked in-kernel).
        tile_map = lambda c, j: (jnp.minimum(c * tpc + j, last_tile), 0)

    kernel = _make_kernel(B, block_b, tpc, needs_mask)

    cost = pl.CostEstimate(
        flops=int(12 * B * D),
        transcendentals=int(2 * B * D + 2 * B + D),
        bytes_accessed=int(B * D * (t_item + s_item) + D * 4
                           + num_splits * (D + 128) * 4),
    )

    partial_loss, partial_bp = pl.pallas_call(
        kernel,
        out_shape=(
            jax.ShapeDtypeStruct((num_splits, 1, 128), jnp.float32),
            jax.ShapeDtypeStruct((num_splits, 1, D), jnp.float32),
        ),
        grid=(num_splits, tpc),
        in_specs=[
            pl.BlockSpec((block_b, D), tile_map),
            pl.BlockSpec((block_b, D), tile_map),
            pl.BlockSpec((1, D), lambda c, j: (0, 0)),          # prior: resident
        ],
        out_specs=(
            pl.BlockSpec((1, 1, 128), lambda c, j: (c, 0, 0)),  # per-split loss
            pl.BlockSpec((1, 1, D), lambda c, j: (c, 0, 0)),    # per-split batch prior
        ),
        scratch_shapes=[
            pltpu.VMEM((1, D), jnp.float32),                    # log(prior), hoisted
            pltpu.VMEM((block_b, 1), jnp.float32),              # per-row loss accumulator
        ],
        compiler_params=pltpu.CompilerParams(
            dimension_semantics=("parallel", "arbitrary"),      # split axis, reduction axis
            vmem_limit_bytes=int(budget),
        ),
        cost_estimate=cost,
    )(teacher_output, student_output, prior)

    # Tiny O(D) XLA epilogue: combine per-split partials, normalize, prior momentum.
    loss = jnp.sum(partial_loss[:, 0, 0]) / jnp.float32(B)
    bp = jnp.sum(partial_bp[:, 0, :], axis=0, keepdims=True)               # [1, D]
    bp = bp / jnp.sum(bp) * jnp.float32(D)
    new_prior = prior * PRIOR_MOMENTUM + bp * (1.0 - PRIOR_MOMENTUM)
    return loss, new_prior


def protocpc_loss_ref(teacher_output, student_output, prior):
    """Pure-JAX reference matching the PyTorch forward."""
    s = student_output.astype(jnp.float32) / STUDENT_TEMP
    p = jax.nn.softmax(teacher_output.astype(jnp.float32) / TEACHER_TEMP, axis=-1)
    loss1 = -jnp.sum(p * s, axis=1)
    loss2 = jax.nn.logsumexp(s + jnp.log(prior), axis=1)
    loss = jnp.mean(loss1 + loss2)
    batch_prior = jnp.sum(p, axis=0, keepdims=True)
    batch_prior = batch_prior / jnp.sum(batch_prior) * batch_prior.shape[1]
    new_prior = prior * PRIOR_MOMENTUM + batch_prior * (1.0 - PRIOR_MOMENTUM)
    return loss, new_prior


if __name__ == "__main__":
    # Small shapes: D=512 stands in for out_dim=65536. batch=28 is not a multiple of
    # the 8-row tile, so the in-kernel masking of the ragged trailing tile is exercised.
    key = jax.random.PRNGKey(0)
    k1, k2 = jax.random.split(key)

    B, D = 28, 512
    teacher = jax.random.normal(k1, (B, D), dtype=jnp.float32)
    student = jax.random.normal(k2, (B, D), dtype=jnp.float32)
    prior = jnp.ones((1, D), dtype=jnp.float32)   # register_buffer('prior', ones(1, out_dim))
    loss_ref, new_prior_ref = protocpc_loss_ref(teacher, student, prior)

    # Explicit small tile: 4 tiles -> 2 splits x 2 tiles, ragged last tile masked in-kernel.
    loss, new_prior = protocpc_loss(teacher, student, prior, block_b=8)
    jax.block_until_ready((loss, new_prior))
    assert jnp.allclose(loss, loss_ref, rtol=1e-5, atol=1e-5), (loss, loss_ref)
    assert jnp.allclose(new_prior, new_prior_ref, rtol=1e-5, atol=1e-5)

    # Auto-sized tile (default sizing path).
    loss2, new_prior2 = protocpc_loss(teacher, student, prior)
    jax.block_until_ready((loss2, new_prior2))
    assert jnp.allclose(loss2, loss_ref, rtol=1e-5, atol=1e-5), (loss2, loss_ref)
    assert jnp.allclose(new_prior2, new_prior_ref, rtol=1e-5, atol=1e-5)

    # Odd tile count: exercises the clamped index map + fully-masked duplicate tile.
    B3 = 20
    teacher3 = teacher[:B3]
    student3 = student[:B3]
    loss3_ref, new_prior3_ref = protocpc_loss_ref(teacher3, student3, prior)
    loss3, new_prior3 = protocpc_loss(teacher3, student3, prior, block_b=8)
    jax.block_until_ready((loss3, new_prior3))
    assert jnp.allclose(loss3, loss3_ref, rtol=1e-5, atol=1e-5), (loss3, loss3_ref)
    assert jnp.allclose(new_prior3, new_prior3_ref, rtol=1e-5, atol=1e-5)

    print("KERNEL_OK")
</pallas_src>

<mosaic_0001>
module attributes {stable_mosaic.version = 11 : i64} {
  func.func @kernel(%arg0: i32, %arg1: i32, %arg2: memref<8x512xf32, #tpu.memory_space<vmem>>, %arg3: memref<8x512xf32, #tpu.memory_space<vmem>>, %arg4: memref<1x512xf32, #tpu.memory_space<vmem>>, %arg5: memref<1x1x128xf32, #tpu.memory_space<vmem>>, %arg6: memref<1x1x512xf32, #tpu.memory_space<vmem>>, %arg7: memref<1x512xf32, #tpu.memory_space<vmem>>, %arg8: memref<8x1xf32, #tpu.memory_space<vmem>>) attributes {dimension_semantics = [#tpu.dimension_semantics<parallel>, #tpu.dimension_semantics<arbitrary>], iteration_bounds = array<i64: 2, 2>, scalar_prefetch = 0 : i64, scratch_operands = 2 : i64, tpu.core_type = #tpu.core_type<tc>, window_params = [{transform_indices = @transform_0, window_bounds = array<i64: 8, 512>}, {transform_indices = @transform_1, window_bounds = array<i64: 8, 512>}, {pipeline_mode = #tpu.pipeline_mode<synchronous>, transform_indices = @transform_2, window_bounds = array<i64: 1, 512>}, {transform_indices = @transform_3, window_bounds = array<i64: 1, 1, 128>}, {transform_indices = @transform_4, window_bounds = array<i64: 1, 1, 512>}]} {
    %c0_i32 = arith.constant 0 : i32
    %0 = arith.cmpi eq, %arg1, %c0_i32 : i32
    %1 = arith.extui %0 : i1 to i32
    %c0_i32_0 = arith.constant 0 : i32
    %2 = arith.cmpi ne, %1, %c0_i32_0 : i32
    scf.if %2 {
      %c0_27 = arith.constant 0 : index
      %c0_28 = arith.constant 0 : index
      %70 = vector.load %arg4[%c0_27, %c0_28] : memref<1x512xf32, #tpu.memory_space<vmem>>, vector<1x512xf32>
      %71 = math.log %70 : vector<1x512xf32>
      %c0_29 = arith.constant 0 : index
      %c0_30 = arith.constant 0 : index
      %72 = vector.load %arg7[%c0_29, %c0_30] : memref<1x512xf32, #tpu.memory_space<vmem>>, vector<1x512xf32>
      tpu.vector_store %arg7[%c0_29, %c0_30], %71 {strides = array<i32>} : memref<1x512xf32, #tpu.memory_space<vmem>>, vector<1x512xf32>,
      %cst_31 = arith.constant 0.000000e+00 : f32
      %73 = vector.broadcast %cst_31 : f32 to vector<1x1x512xf32>
      %c0_32 = arith.constant 0 : index
      %c0_33 = arith.constant 0 : index
      %c0_34 = arith.constant 0 : index
      %74 = vector.load %arg6[%c0_32, %c0_33, %c0_34] : memref<1x1x512xf32, #tpu.memory_space<vmem>>, vector<1x1x512xf32>
      tpu.vector_store %arg6[%c0_32, %c0_33, %c0_34], %73 {strides = array<i32>} : memref<1x1x512xf32, #tpu.memory_space<vmem>>, vector<1x1x512xf32>,
      %cst_35 = arith.constant 0.000000e+00 : f32
      %75 = vector.broadcast %cst_35 : f32 to vector<8x1xf32>
      %c0_36 = arith.constant 0 : index
      %c0_37 = arith.constant 0 : index
      %76 = vector.load %arg8[%c0_36, %c0_37] : memref<8x1xf32, #tpu.memory_space<vmem>>, vector<8x1xf32>
      tpu.vector_store %arg8[%c0_36, %c0_37], %75 {strides = array<i32>} : memref<8x1xf32, #tpu.memory_space<vmem>>, vector<8x1xf32>,
    } else {
    }
    %c0 = arith.constant 0 : index
    %c0_1 = arith.constant 0 : index
    %3 = vector.load %arg2[%c0, %c0_1] : memref<8x512xf32, #tpu.memory_space<vmem>>, vector<8x512xf32>
    %c0_2 = arith.constant 0 : index
    %c0_3 = arith.constant 0 : index
    %4 = vector.load %arg3[%c0_2, %c0_3] : memref<8x512xf32, #tpu.memory_space<vmem>>, vector<8x512xf32>
    %c2_i32 = arith.constant 2 : i32
    %5 = arith.muli %arg0, %c2_i32 : i32
    %6 = arith.addi %5, %arg1 : i32
    %c8_i32 = arith.constant 8 : i32
    %7 = arith.muli %6, %c8_i32 : i32
    %8 = tpu.iota {dimensions = array<i32: 0>} : vector<8x1xi32>
    %9 = vector.broadcast %7 : i32 to vector<8x1xi32>
    %10 = arith.addi %9, %8 : vector<8x1xi32>
    %c28_i32 = arith.constant 28 : i32
    %11 = vector.broadcast %c28_i32 : i32 to vector<8x1xi32>
    %12 = arith.cmpi slt, %10, %11 : vector<8x1xi32>
    %13 = arith.extui %12 : vector<8x1xi1> to vector<8x1xi32>
    %14 = arith.sitofp %13 : vector<8x1xi32> to vector<8x1xf32>
    %cst = arith.constant 0.000000e+00 : f32
    %15 = vector.shape_cast %12 : vector<8x1xi1> to vector<8x1xi1>
    %16 = vector.broadcast %15 : vector<8x1xi1> to vector<8x512xi1>
    %17 = vector.broadcast %cst : f32 to vector<8x512xf32>
    %18 = arith.select %16, %3, %17 : vector<8x512xi1>, vector<8x512xf32>
    %cst_4 = arith.constant 0.000000e+00 : f32
    %19 = vector.shape_cast %12 : vector<8x1xi1> to vector<8x1xi1>
    %20 = vector.broadcast %19 : vector<8x1xi1> to vector<8x512xi1>
    %21 = vector.broadcast %cst_4 : f32 to vector<8x512xf32>
    %22 = arith.select %20, %4, %21 : vector<8x512xi1>, vector<8x512xf32>
    %cst_5 = arith.constant 2.500000e+01 : f32
    %23 = vector.broadcast %cst_5 : f32 to vector<8x512xf32>
    %24 = arith.mulf %18, %23 : vector<8x512xf32>
    %cst_6 = arith.constant 1.000000e+01 : f32
    %25 = vector.broadcast %cst_6 : f32 to vector<8x512xf32>
    %26 = arith.mulf %22, %25 : vector<8x512xf32>
    %cst_7 = arith.constant dense<0xFF800000> : vector<8xf32>
    %27 = vector.multi_reduction <maximumf>, %24, %cst_7 [1] : vector<8x512xf32> to vector<8xf32>
    %28 = vector.shape_cast %27 : vector<8xf32> to vector<8x1xf32>
    %29 = vector.broadcast %28 : vector<8x1xf32> to vector<8x512xf32>
    %30 = arith.subf %24, %29 : vector<8x512xf32>
    %31 = math.exp %30 : vector<8x512xf32>
    %cst_8 = arith.constant dense<0.000000e+00> : vector<8xf32>
    %32 = vector.multi_reduction <add>, %31, %cst_8 [1] : vector<8x512xf32> to vector<8xf32>
    %33 = vector.shape_cast %32 : vector<8xf32> to vector<8x1xf32>
    %34 = tpu.reciprocal %33 : vector<8x1xf32> -> vector<8x1xf32>
    %35 = arith.mulf %34, %14 : vector<8x1xf32>
    %36 = arith.mulf %31, %26 : vector<8x512xf32>
    %cst_9 = arith.constant dense<0.000000e+00> : vector<8xf32>
    %37 = vector.multi_reduction <add>, %36, %cst_9 [1] : vector<8x512xf32> to vector<8xf32>
    %38 = vector.shape_cast %37 : vector<8xf32> to vector<8x1xf32>
    %39 = arith.mulf %38, %34 : vector<8x1xf32>
    %cst_10 = arith.constant 0.000000e+00 : f32
    %40 = vector.broadcast %cst_10 : f32 to vector<8x1xf32>
    %41 = arith.subf %40, %39 : vector<8x1xf32>
    %c0_11 = arith.constant 0 : index
    %c0_12 = arith.constant 0 : index
    %c0_13 = arith.constant 0 : index
    %42 = vector.load %arg6[%c0_11, %c0_12, %c0_13] : memref<1x1x512xf32, #tpu.memory_space<vmem>>, vector<1x1x512xf32>
    %43 = vector.broadcast %35 : vector<8x1xf32> to vector<8x512xf32>
    %44 = arith.mulf %31, %43 : vector<8x512xf32>
    %cst_14 = arith.constant dense<0.000000e+00> : vector<512xf32>
    %45 = vector.multi_reduction <add>, %44, %cst_14 [0] : vector<8x512xf32> to vector<512xf32>
    %46 = vector.shape_cast %45 : vector<512xf32> to vector<1x512xf32>
    %47 = vector.shape_cast %46 : vector<1x512xf32> to vector<1x1x512xf32>
    %48 = arith.addf %42, %47 : vector<1x1x512xf32>
    %c0_15 = arith.constant 0 : index
    %c0_16 = arith.constant 0 : index
    %c0_17 = arith.constant 0 : index
    %49 = vector.load %arg6[%c0_15, %c0_16, %c0_17] : memref<1x1x512xf32, #tpu.memory_space<vmem>>, vector<1x1x512xf32>
    tpu.vector_store %arg6[%c0_15, %c0_16, %c0_17], %48 {strides = array<i32>} : memref<1x1x512xf32, #tpu.memory_space<vmem>>, vector<1x1x512xf32>,
    %c0_18 = arith.constant 0 : index
    %c0_19 = arith.constant 0 : index
    %50 = vector.load %arg7[%c0_18, %c0_19] : memref<1x512xf32, #tpu.memory_space<vmem>>, vector<1x512xf32>
    %51 = vector.broadcast %50 : vector<1x512xf32> to vector<8x512xf32>
    %52 = arith.addf %26, %51 : vector<8x512xf32>
    %cst_20 = arith.constant dense<0xFF800000> : vector<8xf32>
    %53 = vector.multi_reduction <maximumf>, %52, %cst_20 [1] : vector<8x512xf32> to vector<8xf32>
    %54 = vector.shape_cast %53 : vector<8xf32> to vector<8x1xf32>
    %55 = vector.broadcast %54 : vector<8x1xf32> to vector<8x512xf32>
    %56 = arith.subf %52, %55 : vector<8x512xf32>
    %57 = math.exp %56 : vector<8x512xf32>
    %cst_21 = arith.constant dense<0.000000e+00> : vector<8xf32>
    %58 = vector.multi_reduction <add>, %57, %cst_21 [1] : vector<8x512xf32> to vector<8xf32>
    %59 = vector.shape_cast %58 : vector<8xf32> to vector<8x1xf32>
    %60 = math.log %59 : vector<8x1xf32>
    %61 = arith.addf %60, %54 : vector<8x1xf32>
    %62 = arith.addf %41, %61 : vector<8x1xf32>
    %63 = arith.mulf %62, %14 : vector<8x1xf32>
    %c0_22 = arith.constant 0 : index
    %c0_23 = arith.constant 0 : index
    %64 = vector.load %arg8[%c0_22, %c0_23] : memref<8x1xf32, #tpu.memory_space<vmem>>, vector<8x1xf32>
    %65 = arith.addf %64, %63 : vector<8x1xf32>
    %c0_24 = arith.constant 0 : index
    %c0_25 = arith.constant 0 : index
    %66 = vector.load %arg8[%c0_24, %c0_25] : memref<8x1xf32, #tpu.memory_space<vmem>>, vector<8x1xf32>
    tpu.vector_store %arg8[%c0_24, %c0_25], %65 {strides = array<i32>} : memref<8x1xf32, #tpu.memory_space<vmem>>, vector<8x1xf32>,
    %c1_i32 = arith.constant 1 : i32
    %67 = arith.cmpi eq, %arg1, %c1_i32 : i32
    %68 = arith.extui %67 : i1 to i32
    %c0_i32_26 = arith.constant 0 : i32
    %69 = arith.cmpi ne, %68, %c0_i32_26 : i32
    scf.if %69 {
      %c0_27 = arith.constant 0 : index
      %c0_28 = arith.constant 0 : index
      %70 = vector.load %arg8[%c0_27, %c0_28] : memref<8x1xf32, #tpu.memory_space<vmem>>, vector<8x1xf32>
      %71 = vector.shape_cast %70 : vector<8x1xf32> to vector<1x8x1xf32>
      %cst_29 = arith.constant dense<0.000000e+00> : vector<1xf32>
      %72 = vector.multi_reduction <add>, %71, %cst_29 [1, 2] : vector<1x8x1xf32> to vector<1xf32>
      %73 = vector.shape_cast %72 : vector<1xf32> to vector<1x1x1xf32>
      %74 = vector.extract %73[0, 0, 0] : f32 from vector<1x1x1xf32>
      %75 = vector.broadcast %74 : f32 to vector<1x1x128xf32>
      %c0_30 = arith.constant 0 : index
      %c0_31 = arith.constant 0 : index
      %c0_32 = arith.constant 0 : index
      %76 = vector.load %arg5[%c0_30, %c0_31, %c0_32] : memref<1x1x128xf32, #tpu.memory_space<vmem>>, vector<1x1x128xf32>
      tpu.vector_store %arg5[%c0_30, %c0_31, %c0_32], %75 {strides = array<i32>} : memref<1x1x128xf32, #tpu.memory_space<vmem>>, vector<1x1x128xf32>,
    } else {
    }
    return
  }
  func.func @transform_0(%arg0: i32, %arg1: i32) -> (i32, i32) {
    %c2_i32 = arith.constant 2 : i32
    %0 = arith.muli %arg0, %c2_i32 : i32
    %1 = arith.addi %0, %arg1 : i32
    %c0_i32 = arith.constant 0 : i32
    %c0_i32_0 = arith.constant 0 : i32
    return %1, %c0_i32 : i32, i32
  }
  func.func @transform_1(%arg0: i32, %arg1: i32) -> (i32, i32) {
    %c2_i32 = arith.constant 2 : i32
    %0 = arith.muli %arg0, %c2_i32 : i32
    %1 = arith.addi %0, %arg1 : i32
    %c0_i32 = arith.constant 0 : i32
    %c0_i32_0 = arith.constant 0 : i32
    return %1, %c0_i32 : i32, i32
  }
  func.func @transform_2(%arg0: i32, %arg1: i32) -> (i32, i32) {
    %c0_i32 = arith.constant 0 : i32
    %c0_i32_0 = arith.constant 0 : i32
    %c0_i32_1 = arith.constant 0 : i32
    return %c0_i32, %c0_i32_0 : i32, i32
  }
  func.func @transform_3(%arg0: i32, %arg1: i32) -> (i32, i32, i32) {
    %c0_i32 = arith.constant 0 : i32
    %c0_i32_0 = arith.constant 0 : i32
    %c0_i32_1 = arith.constant 0 : i32
    return %arg0, %c0_i32, %c0_i32_0 : i32, i32, i32
  }
  func.func @transform_4(%arg0: i32, %arg1: i32) -> (i32, i32, i32) {
    %c0_i32 = arith.constant 0 : i32
    %c0_i32_0 = arith.constant 0 : i32
    %c0_i32_1 = arith.constant 0 : i32
    return %arg0, %c0_i32, %c0_i32_0 : i32, i32, i32
  }
}

</mosaic_0001>

<llo_original>
// kernel: tpu_custom_call.1
$region0: #{tpu_custom_call.1}
  #allocation0 [shape = 'u32[]', space=smem, size = 0x4, offset = 0x4, fixed_abs, tag = 'smem constant byte address 0x4 - core index']
  #allocation1 [shape = 'u32[144,128]{1,0:T(1,128)}', space=vmem, size = 0x12000, scoped, tag = 'internal scratch']
  #allocation2 [shape = 'f32[1,512]{1,0:T(1,128)}', space=vmem, size = 0x800, scoped, tag = 'scratch operand']
  #allocation3 [shape = 'f32[8,1]{1,0:T(8,128)}', space=vmem, size = 0x1000, scoped, tag = 'scratch operand']
  %s0 = inlined_call_operand.hbm [shape: f32[28,512], index: 0, kind: input, shape index: {}]
  %s1 = inlined_call_operand.hbm [shape: f32[28,512], index: 1, kind: input, shape index: {}]
  %s2 = inlined_call_operand.hbm [shape: f32[1,512], index: 2, kind: input, shape index: {}]
  %s3 = inlined_call_operand.hbm [shape: f32[2,1,128], index: 3, kind: output, shape index: {0}]
  %s4 = inlined_call_operand.hbm [shape: f32[2,1,512], index: 4, kind: output, shape index: {1}]
  %5 = xla_tuple %s3, %s4
  %s6 = sld [smem:[#allocation0]]
  $region73: #{tpu_custom_call.1} parent=0
    _
  %s8 = ssub.s32 1, %s6
  %s9 = scalar_select 0, %s8, %s6
  $region1: #{tpu_custom_call.1} parent=0
    #allocation4 [shape = 'u8[32768]{0}', space=vmem, size = 0x8000, scoped, tag = 'input window, operand 0']
    #allocation5 [shape = 's32[2]{0}', space=sflag, size = 0x8, scoped, tag = 'scoped memory for tpu_custom_call.1']
    #allocation6 [shape = 's32[2]{0}', space=sflag, size = 0x8, scoped, tag = 'scoped memory for tpu_custom_call.1']
    #allocation7 [shape = 'u8[32768]{0}', space=vmem, size = 0x8000, scoped, tag = 'input window, operand 1']
    #allocation8 [shape = 's32[2]{0}', space=sflag, size = 0x8, scoped, tag = 'scoped memory for tpu_custom_call.1']
    #allocation9 [shape = 'u8[2048]{0}', space=vmem, size = 0x800, scoped, tag = 'input window, operand 2, single buffered']
    #allocation10 [shape = 'u8[1024]{0}', space=vmem, size = 0x400, scoped, tag = 'output window, operand 0']
    #allocation11 [shape = 'u8[4096]{0}', space=vmem, size = 0x1000, scoped, tag = 'output window, operand 1']
    #allocation12 [shape = 's32[2]{0}', space=sflag, size = 0x8, scoped, tag = 'scoped memory for tpu_custom_call.1']
    %10 = vsyncpa [#allocation5], 0
    %s11 = scalar_lea.sflag [#allocation5], 1
    %12 = vsyncpa %s11, 0
    %13 = vsyncpa [#allocation8], 0
    %s14 = scalar_lea.sflag [#allocation8], 1
    %15 = vsyncpa %s14, 0
    %16 = vsyncpa [#allocation6], 0
    %s17 = scalar_lea.sflag [#allocation6], 1
    %18 = vsyncpa %s17, 0
    %19 = vsyncpa [#allocation12], 0
    %s20 = scalar_lea.sflag [#allocation12], 1
    %21 = vsyncpa %s20, 0
    loop: start=0, step=1, limit=6
    $region2: #{tpu_custom_call.1} parent=1 // loop_pre_header
      _
    $region3: #{tpu_custom_call.1} parent=1 // loop_header
      %s23 = sphi 0, %s27
      %p24 = scmp.ge.s32.totalorder %s23, 6
      %s30 = sphi 0, %s42
      %s31 = sphi 0, %s38
      %s32 = sphi 0, %s30
      %s33 = sphi 0, %s31
      %s34 = sphi 0, %s32
      %s35 = sphi 0, %s33
      %s49 = sphi 0, %s51
      %s52 = sphi 0, %s49
      %s53 = sphi 0, %s52
      %s69 = sphi 0, %s53
      %s79 = sphi 0, %s81
      %s82 = sphi 0, %s79
      %s83 = sphi 0, %s82
      %s99 = sphi 0, %s83
      %s103 = sphi 0, %s103
      %s105 = sphi 0, %s103
      %s106 = sphi 0, %s105
      %s120 = sphi 0, %s106
      %s126 = sphi 0, %s128
      %s129 = sphi 0, %s126
      %s130 = sphi 0, %s129
      %s146 = sphi 0, %s130
      %s152 = sphi 0, %s154
      %s155 = sphi 0, %s152
      %s156 = sphi 0, %s155
      %s172 = sphi 0, %s156
    $region4: #{tpu_custom_call.1} parent=1 // loop_header_branch
      %26 = sbr.rel (%p24) target = $region8
    $region5: #{tpu_custom_call.1} parent=1 // loop_body
      %s28 = ssub.s32 %s23, 1
      %s29 = ssub.s32 %s23, 2
      %s36 = sadd.s32 1, %s31
      %p37 = scmp.ge.s32.totalorder %s36, 2
      %s38 = scalar_select %p37, 0, %s36
      %s39 = sadd.s32 1, %s30
      %s40 = scalar_select %p37, %s39, %s30
      %p41 = scmp.ge.s32.totalorder %s40, 2
      %s42 = scalar_select %p41, 0, %s40
      %s43 = smul.u32 %s30, 2
      %s44 = sadd.s32 %s43, %s31
      %s45 = smul.u32 %s42, 2
      %s46 = sadd.s32 %s45, %s38
      %s47 = ssub.s32 %s44, %s46
      %p48 = scmp.eq.s32.totalorder %s47, 0
      %s50 = sadd.s32 %s49, 1
      %s51 = scalar_select %p48, %s49, %s50
      %p54 = pneg %p48
      %p55 = scmp.eq.s32.totalorder %s23, 3
      %p56 = por %p54, %p55
      %p57 = scmp.ne.s32.totalorder %s49, %s52
      %p58 = scmp.eq.s32.totalorder %s23, 0
      %p59 = por %p57, %p58
      %p60 = scmp.ne.s32.totalorder %s49, %s52
      %p61 = scmp.eq.s32.totalorder %s28, 3
      %p62 = por %p60, %p61
      %p63 = scmp.ne.s32.totalorder %s52, %s53
      %p64 = scmp.eq.s32.totalorder %s28, 0
      %p65 = por %p63, %p64
      %p66 = scmp.ne.s32.totalorder %s52, %s53
      %p67 = scmp.eq.s32.totalorder %s29, 3
      %p68 = por %p66, %p67
      %p70 = scmp.ne.s32.totalorder %s53, %s69
      %p71 = scmp.eq.s32.totalorder %s29, 0
      %p72 = por %p70, %p71
      %s73 = smul.u32 %s30, 2
      %s74 = sadd.s32 %s73, %s31
      %s75 = smul.u32 %s42, 2
      %s76 = sadd.s32 %s75, %s38
      %s77 = ssub.s32 %s74, %s76
      %p78 = scmp.eq.s32.totalorder %s77, 0
      %s80 = sadd.s32 %s79, 1
      %s81 = scalar_select %p78, %s79, %s80
      %p84 = pneg %p78
      %p85 = scmp.eq.s32.totalorder %s23, 3
      %p86 = por %p84, %p85
      %p87 = scmp.ne.s32.totalorder %s79, %s82
      %p88 = scmp.eq.s32.totalorder %s23, 0
      %p89 = por %p87, %p88
      %p90 = scmp.ne.s32.totalorder %s79, %s82
      %p91 = scmp.eq.s32.totalorder %s28, 3
      %p92 = por %p90, %p91
      %p93 = scmp.ne.s32.totalorder %s82, %s83
      %p94 = scmp.eq.s32.totalorder %s28, 0
      %p95 = por %p93, %p94
      %p96 = scmp.ne.s32.totalorder %s82, %s83
      %p97 = scmp.eq.s32.totalorder %s29, 3
      %p98 = por %p96, %p97
      %p100 = scmp.ne.s32.totalorder %s83, %s99
      %p101 = scmp.eq.s32.totalorder %s29, 0
      %p102 = por %p100, %p101
      %s104 = sadd.s32 %s103, 1
      %p107 = scmp.eq.s32.totalorder %s23, 3
      %p108 = scmp.ne.s32.totalorder %s103, %s105
      %p109 = scmp.eq.s32.totalorder %s23, 0
      %p110 = por %p108, %p109
      %p111 = scmp.ne.s32.totalorder %s103, %s105
      %p112 = scmp.eq.s32.totalorder %s28, 3
      %p113 = por %p111, %p112
      %p114 = scmp.ne.s32.totalorder %s105, %s106
      %p115 = scmp.eq.s32.totalorder %s28, 0
      %p116 = por %p114, %p115
      %p117 = scmp.ne.s32.totalorder %s105, %s106
      %p118 = scmp.eq.s32.totalorder %s29, 3
      %p119 = por %p117, %p118
      %p121 = scmp.ne.s32.totalorder %s106, %s120
      %p122 = scmp.eq.s32.totalorder %s29, 0
      %p123 = por %p121, %p122
      %s124 = ssub.s32 %s30, %s42
      %p125 = scmp.eq.s32.totalorder %s124, 0
      %s127 = sadd.s32 %s126, 1
      %s128 = scalar_select %p125, %s126, %s127
      %p131 = pneg %p125
      %p132 = scmp.eq.s32.totalorder %s23, 3
      %p133 = por %p131, %p132
      %p134 = scmp.ne.s32.totalorder %s126, %s129
      %p135 = scmp.eq.s32.totalorder %s23, 0
      %p136 = por %p134, %p135
      %p137 = scmp.ne.s32.totalorder %s126, %s129
      %p138 = scmp.eq.s32.totalorder %s28, 3
      %p139 = por %p137, %p138
      %p140 = scmp.ne.s32.totalorder %s129, %s130
      %p141 = scmp.eq.s32.totalorder %s28, 0
      %p142 = por %p140, %p141
      %p143 = scmp.ne.s32.totalorder %s129, %s130
      %p144 = scmp.eq.s32.totalorder %s29, 3
      %p145 = por %p143, %p144
      %p147 = scmp.ne.s32.totalorder %s130, %s146
      %p148 = scmp.eq.s32.totalorder %s29, 0
      %p149 = por %p147, %p148
      %s150 = ssub.s32 %s30, %s42
      %p151 = scmp.eq.s32.totalorder %s150, 0
      %s153 = sadd.s32 %s152, 1
      %s154 = scalar_select %p151, %s152, %s153
      %p157 = pneg %p151
      %p158 = scmp.eq.s32.totalorder %s23, 3
      %p159 = por %p157, %p158
      %p160 = scmp.ne.s32.totalorder %s152, %s155
      %p161 = scmp.eq.s32.totalorder %s23, 0
      %p162 = por %p160, %p161
      %p163 = scmp.ne.s32.totalorder %s152, %s155
      %p164 = scmp.eq.s32.totalorder %s28, 3
      %p165 = por %p163, %p164
      %p166 = scmp.ne.s32.totalorder %s155, %s156
      %p167 = scmp.eq.s32.totalorder %s28, 0
      %p168 = por %p166, %p167
      %p169 = scmp.ne.s32.totalorder %s155, %s156
      %p170 = scmp.eq.s32.totalorder %s29, 3
      %p171 = por %p169, %p170
      %p173 = scmp.ne.s32.totalorder %s156, %s172
      %p174 = scmp.eq.s32.totalorder %s29, 0
      %p175 = por %p173, %p174
      %p176 = scmp.le.s32.totalorder 1, %s23
      %p177 = scmp.lt.s32.totalorder %s23, 5
      %p178 = pnand %p176, %p177
      %p179 = pneg %p178
      // Predicated region
      $region9: #{tpu_custom_call.1} parent=5 // pred_check
        _
      $region10: #{tpu_custom_call.1} parent=5 // pred_check_branch
        %181 = sbr.rel (%p178) target = $region12
      $region11: #{tpu_custom_call.1} parent=5 // pred_region
        %s182 = ssub.s32 %s23, 1
        // Predicated region
        $region13: #{tpu_custom_call.1} parent=11 // pred_check
          %p183 = pneg %p116
        $region14: #{tpu_custom_call.1} parent=11 // pred_check_branch
          %185 = sbr.rel (%p183) target = $region16
        $region15: #{tpu_custom_call.1} parent=11 // pred_region
          %s187 = ssub.s32 64, 64
          %188 = vsyncadd [#allocation8], %s187
          %s190 = sshll.u32 [#allocation9], 4
          %s191 = int_to_ptr.vmem [resolvable:$true] %s190
          %193 = dma.hbm_to_vmem [thread:$0]  %s2, 64, %s191, [#allocation8]
        $region16: #{tpu_custom_call.1} parent=11 // pred_fallthru
          _
      $region12: #{tpu_custom_call.1} parent=5 // pred_fallthru
        _
      %p194 = scmp.lt.s32.totalorder %s23, 4
      // Predicated region
      $region17: #{tpu_custom_call.1} parent=5 // pred_check
        %p195 = pneg %p194
      $region18: #{tpu_custom_call.1} parent=5 // pred_check_branch
        %197 = sbr.rel (%p195) target = $region20
      $region19: #{tpu_custom_call.1} parent=5 // pred_region
        // Predicated region
        $region21: #{tpu_custom_call.1} parent=19 // pred_check
          %p198 = pneg %p59
        $region22: #{tpu_custom_call.1} parent=19 // pred_check_branch
          %200 = sbr.rel (%p198) target = $region24
        $region23: #{tpu_custom_call.1} parent=19 // pred_region
          %s201 = sand.u32 %s49, 1
          %s202 = scalar_lea.sflag [#allocation5], %s201
          %s203 = sand.u32 %s49, 1
          %s204 = smul.addr %s203, 32
          %s205 = scalar_lea.vmem [#allocation4], %s204
          %s206 = smul.u32 %s30, 2
          %s207 = sadd.s32 %s206, %s31
          %s209 = ssub.s32 512, 512
          %210 = vsyncadd %s202, %s209
          %s211 = smul.addr %s207, 4
          %s212 = smul.addr %s211, 128
          %s213 = scalar_lea.hbm %s0, %s212
          %s215 = sshll.u32 %s205, 4
          %s216 = int_to_ptr.vmem [resolvable:$true] %s215
          %218 = dma.hbm_to_vmem [thread:$0]  %s213, 512, %s216, %s202
        $region24: #{tpu_custom_call.1} parent=19 // pred_fallthru
          _
        // Predicated region
        $region25: #{tpu_custom_call.1} parent=19 // pred_check
          %p219 = pneg %p89
        $region26: #{tpu_custom_call.1} parent=19 // pred_check_branch
          %221 = sbr.rel (%p219) target = $region28
        $region27: #{tpu_custom_call.1} parent=19 // pred_region
          %s222 = sand.u32 %s23, 1
          %s223 = scalar_lea.sflag [#allocation8], %s222
          %s224 = sand.u32 %s79, 1
          %s225 = smul.addr %s224, 32
          %s226 = scalar_lea.vmem [#allocation7], %s225
          %s227 = smul.u32 %s30, 2
          %s228 = sadd.s32 %s227, %s31
          %s230 = ssub.s32 512, 512
          %231 = vsyncadd %s223, %s230
          %s232 = smul.addr %s228, 4
          %s233 = smul.addr %s232, 128
          %s234 = scalar_lea.hbm %s1, %s233
          %s236 = sshll.u32 %s226, 4
          %s237 = int_to_ptr.vmem [resolvable:$true] %s236
          %239 = dma.hbm_to_vmem [thread:$0]  %s234, 512, %s237, %s223
        $region28: #{tpu_custom_call.1} parent=19 // pred_fallthru
          _
      $region20: #{tpu_custom_call.1} parent=5 // pred_fallthru
        _
      %p240 = scmp.le.s32.totalorder 1, %s23
      %p241 = scmp.lt.s32.totalorder %s23, 5
      %p242 = pnand %p240, %p241
      %p243 = pneg %p242
      // Predicated region
      $region29: #{tpu_custom_call.1} parent=5 // pred_check
        _
      $region30: #{tpu_custom_call.1} parent=5 // pred_check_branch
        %245 = sbr.rel (%p242) target = $region32
      $region31: #{tpu_custom_call.1} parent=5 // pred_region
        %s246 = ssub.s32 %s23, 1
        %s247 = sand.u32 %s52, 1
        %s248 = scalar_lea.sflag [#allocation5], %s247
        %s249 = sand.u32 %s52, 1
        %s250 = smul.addr %s249, 32
        %s251 = scalar_lea.vmem [#allocation4], %s250
        // Predicated region
        $region33: #{tpu_custom_call.1} parent=31 // pred_check
          %p252 = pneg %p65
        $region34: #{tpu_custom_call.1} parent=31 // pred_check_branch
          %254 = sbr.rel (%p252) target = $region36
        $region35: #{tpu_custom_call.1} parent=31 // pred_region
          %255 = dma.done %s248, 512
        $region36: #{tpu_custom_call.1} parent=31 // pred_fallthru
          _
        %s256 = sand.u32 %s28, 1
        %s257 = scalar_lea.sflag [#allocation8], %s256
        %s258 = sand.u32 %s82, 1
        %s259 = smul.addr %s258, 32
        %s260 = scalar_lea.vmem [#allocation7], %s259
        // Predicated region
        $region37: #{tpu_custom_call.1} parent=31 // pred_check
          %p261 = pneg %p95
        $region38: #{tpu_custom_call.1} parent=31 // pred_check_branch
          %263 = sbr.rel (%p261) target = $region40
        $region39: #{tpu_custom_call.1} parent=31 // pred_region
          %264 = dma.done %s257, 512
        $region40: #{tpu_custom_call.1} parent=31 // pred_fallthru
          _
        // Predicated region
        $region41: #{tpu_custom_call.1} parent=31 // pred_check
          %p265 = pneg %p116
        $region42: #{tpu_custom_call.1} parent=31 // pred_check_branch
          %267 = sbr.rel (%p265) target = $region44
        $region43: #{tpu_custom_call.1} parent=31 // pred_region
          %268 = dma.done [#allocation8], 64
        $region44: #{tpu_custom_call.1} parent=31 // pred_fallthru
          _
        %s269 = sand.u32 %s52, 1
        %s270 = scalar_lea.sflag [#allocation5], %s269
        %s271 = sand.u32 %s52, 1
        %s272 = smul.addr %s271, 32
        %s273 = scalar_lea.vmem [#allocation4], %s272
        %p274 = pneg %p65
        %p275 = pneg %p62
        %s276 = sand.u32 %s28, 1
        %s277 = scalar_lea.sflag [#allocation8], %s276
        %s278 = sand.u32 %s82, 1
        %s279 = smul.addr %s278, 32
        %s280 = scalar_lea.vmem [#allocation7], %s279
        %p281 = pneg %p95
        %p282 = pneg %p92
        %p283 = pneg %p116
        %p284 = pneg %p113
        %p285 = pneg %p142
        %p286 = pneg %p139
        %s287 = sand.u32 %s129, 1
        %s288 = scalar_lea.sflag [#allocation6], %s287
        %s289 = sand.u32 %s129, 1
        %s290 = scalar_lea.vmem [#allocation10], %s289
        %p291 = pneg %p168
        %p292 = pneg %p165
        %s293 = sand.u32 %s155, 1
        %s294 = scalar_lea.sflag [#allocation12], %s293
        %s295 = sand.u32 %s155, 1
        %s296 = smul.addr %s295, 4
        %s297 = scalar_lea.vmem [#allocation11], %s296
        %s298 = smul.u32 %s32, 2
        %s299 = sadd.s32 %s298, %s33
        %s300 = smul.u32 %s32, 2
        %s301 = sadd.s32 %s300, %s33
        %p302 = scmp.eq.s32.totalorder %s33, 0
        // Predicated region
        $region45: #{tpu_custom_call.1} parent=31 // pred_check
          %p303 = pneg %p302
        $region46: #{tpu_custom_call.1} parent=31 // pred_check_branch
          %305 = sbr.rel (%p303) target = $region48
        $region47: #{tpu_custom_call.1} parent=31 // pred_region
          %v306 = vld [vmem:[#allocation9] sm:$0xf]
          %v307 = vlog2.pop %v306
          %v308 = vmul.f32 %v307, 0.6931472
          %v309 = vlaneseq
          %vm310 = vcmp.ge.s32.totalorder %v309, 0
          %vm311 = vcmp.lt.s32.totalorder %v309, 512
          %vm312 = vmand %vm310, %vm311
          %313 = vst.msk [vmem:[#allocation2] sm:$0xf] %vm312, %v308
          %314 = vst.msk [vmem:[%s297] sm:$0xf] %vm312, 0.0
          %vm315 = vcmask 7168
          %316 = vst.msk [vmem:[#allocation3] sm:$0xff] %vm315, 0.0
        $region48: #{tpu_custom_call.1} parent=31 // pred_fallthru
          _
        %v317 = vld [vmem:[%s251] sm:$0xff]
        %v318 = vld [vmem:[%s251 + $0x8] sm:$0xff]
        %v319 = vld [vmem:[%s251 + $0x10] sm:$0xff]
        %v320 = vld [vmem:[%s251 + $0x18] sm:$0xff]
        %v321 = vld [vmem:[%s260] sm:$0xff]
        %v322 = vld [vmem:[%s260 + $0x8] sm:$0xff]
        %v323 = vld [vmem:[%s260 + $0x10] sm:$0xff]
        %v324 = vld [vmem:[%s260 + $0x18] sm:$0xff]
        %s325 = smul.u32 %s32, 2
        %s326 = sadd.s32 %s325, %s33
        %s327 = smul.u32 %s326, 8
        %v328 = vlaneseq
        %v329 = vshrl.u32 %v328, 7
        %v330 = vstv %s327
        %v331 = vadd.s32 %v330, %v329
        %vm332 = vcmp.lt.s32.totalorder %v331, 28
        %v333 = vsel %vm332, 1, 0
        %v334 = vcvt.s32.f32 %v333
        %vm335 = vcmp.eq.s32.totalorder %v333, 1
        %v336 = vsel %vm335, %v317, 0.0
        %v337 = vsel %vm335, %v318, 0.0
        %v338 = vsel %vm335, %v319, 0.0
        %v339 = vsel %vm335, %v320, 0.0
        %v340 = vsel %vm335, %v321, 0.0
        %v341 = vsel %vm335, %v322, 0.0
        %v342 = vsel %vm335, %v323, 0.0
        %v343 = vsel %vm335, %v324, 0.0
        %v344 = vmul.f32 %v336, 25.0
        %v345 = vmul.f32 %v337, 25.0
        %v346 = vmul.f32 %v338, 25.0
        %v347 = vmul.f32 %v339, 25.0
        %v348 = vmul.f32 %v340, 10.0
        %v349 = vmul.f32 %v341, 10.0
        %v350 = vmul.f32 %v342, 10.0
        %v351 = vmul.f32 %v343, 10.0
        %v352 = vmax.f32 %v344, %v345
        %v353 = vmax.f32 %v346, %v347
        %v354 = vmax.f32 %v352, %v353
        %355 = vmax.xlane.f32.xlu0 %v354
        %v356 = vpop.xlane.xlu0 %355
        %v357 = vsub.f32 %v344, %v356
        %v358 = vsub.f32 %v345, %v356
        %v359 = vsub.f32 %v346, %v356
        %v360 = vsub.f32 %v347, %v356
        %v361 = vmul.f32 %v357, 1.442695
        %v362 = vpow.pop %v361
        %v363 = vmul.f32 %v358, 1.442695
        %v364 = vpow.pop %v363
        %v365 = vmul.f32 %v359, 1.442695
        %v366 = vpow.pop %v365
        %v367 = vmul.f32 %v360, 1.442695
        %v368 = vpow.pop %v367
        %v369 = vadd.f32 %v362, %v364
        %v370 = vadd.f32 %v369, %v366
        %v371 = vadd.f32 %v370, %v368
        %372 = vadd.xlane.f32.xlu0 %v371
        %v373 = vpop.xlane.xlu0 %372
        %v374 = vrcp.pop %v373
        %v375 = vmul.f32 %v374, %v334
        %v376 = vmul.f32 %v362, %v348
        %v377 = vmul.f32 %v364, %v349
        %v378 = vmul.f32 %v366, %v350
        %v379 = vmul.f32 %v368, %v351
        %v380 = vadd.f32 %v376, %v377
        %v381 = vadd.f32 %v380, %v378
        %v382 = vadd.f32 %v381, %v379
        %383 = vadd.xlane.f32.xlu0 %v382
        %v384 = vpop.xlane.xlu0 %383
        %v385 = vmul.f32 %v384, %v374
        %v386 = vsub.f32 0.0, %v385
        %v387 = vld [vmem:[%s297] sm:$0xf]
        %v388 = vmul.f32 %v362, %v375
        %v389 = vmul.f32 %v364, %v375
        %v390 = vmul.f32 %v366, %v375
        %v391 = vmul.f32 %v368, %v375
        %v392 = vrot.slane %v388, 4
        %v393 = vadd.f32 %v388, %v392
        %v394 = vrot.slane %v393, 2
        %v395 = vadd.f32 %v393, %v394
        %v396 = vrot.slane %v395, 1
        %v397 = vadd.f32 %v395, %v396
        %v398 = vrot.slane %v389, 4
        %v399 = vadd.f32 %v389, %v398
        %v400 = vrot.slane %v399, 2
        %v401 = vadd.f32 %v399, %v400
        %v402 = vrot.slane %v401, 1
        %v403 = vadd.f32 %v401, %v402
        %v404 = vrot.slane %v390, 4
        %v405 = vadd.f32 %v390, %v404
        %v406 = vrot.slane %v405, 2
        %v407 = vadd.f32 %v405, %v406
        %v408 = vrot.slane %v407, 1
        %v409 = vadd.f32 %v407, %v408
        %v410 = vrot.slane %v391, 4
        %v411 = vadd.f32 %v391, %v410
        %v412 = vrot.slane %v411, 2
        %v413 = vadd.f32 %v411, %v412
        %v414 = vrot.slane %v413, 1
        %v415 = vadd.f32 %v413, %v414
        %v420 = vcombine.low %v397, %v403
        %v421 = vcombine.low %v409, %v415
        %v423 = vunpack.c.l.s4 1966171168
        %v424 = vunpack.c.0.s8 %v423
        %v425 = vlaneseq
        %v426 = vshrl.u32 %v425, 7
        %v427 = vsub.s32 %v424, %v426
        %v428 = vrot.slane %v420, %v427
        %v430 = vunpack.c.l.s4 1966171168
        %v431 = vunpack.c.0.s8 %v430
        %v432 = vlaneseq
        %v433 = vshrl.u32 %v432, 7
        %v434 = vsub.s32 %v431, %v433
        %v435 = vrot.slane %v421, %v434
        %v436 = vcombine.low %v428, %v435
        %v438 = vunpack.c.l.s4 1966171168
        %v439 = vunpack.c.0.s8 %v438
        %v440 = vlaneseq
        %v441 = vshrl.u32 %v440, 7
        %v442 = vsub.s32 %v439, %v441
        %v443 = vrot.slane %v436, %v442
        %v445 = vadd.f32 %v387, %v443
        %v446 = vlaneseq
        %vm447 = vcmp.ge.s32.totalorder %v446, 0
        %vm448 = vcmp.lt.s32.totalorder %v446, 512
        %vm449 = vmand %vm447, %vm448
        %450 = vst.msk [vmem:[%s297] sm:$0xf] %vm449, %v445
        %v451 = vld [vmem:[#allocation2] sm:$0xf]
        %v453 = vlaneseq
        %v454 = vshrl.u32 %v453, 7
        %v455 = vsub.s32 0, %v454
        %v456 = vrot.slane %v451, %v455
        %v457 = vlaneseq
        %v458 = vshrl.u32 %v457, 7
        %v459 = vsub.s32 1, %v458
        %v460 = vrot.slane %v451, %v459
        %v461 = vlaneseq
        %v462 = vshrl.u32 %v461, 7
        %v463 = vsub.s32 2, %v462
        %v464 = vrot.slane %v451, %v463
        %v465 = vlaneseq
        %v466 = vshrl.u32 %v465, 7
        %v467 = vsub.s32 3, %v466
        %v468 = vrot.slane %v451, %v467
        %v473 = vadd.f32 %v348, %v456
        %v474 = vadd.f32 %v349, %v460
        %v475 = vadd.f32 %v350, %v464
        %v476 = vadd.f32 %v351, %v468
        %v477 = vmax.f32 %v473, %v474
        %v478 = vmax.f32 %v475, %v476
        %v479 = vmax.f32 %v477, %v478
        %480 = vmax.xlane.f32.xlu0 %v479
        %v481 = vpop.xlane.xlu0 %480
        %v482 = vsub.f32 %v473, %v481
        %v483 = vsub.f32 %v474, %v481
        %v484 = vsub.f32 %v475, %v481
        %v485 = vsub.f32 %v476, %v481
        %v486 = vmul.f32 %v482, 1.442695
        %v487 = vpow.pop %v486
        %v488 = vmul.f32 %v483, 1.442695
        %v489 = vpow.pop %v488
        %v490 = vmul.f32 %v484, 1.442695
        %v491 = vpow.pop %v490
        %v492 = vmul.f32 %v485, 1.442695
        %v493 = vpow.pop %v492
        %v494 = vadd.f32 %v487, %v489
        %v495 = vadd.f32 %v494, %v491
        %v496 = vadd.f32 %v495, %v493
        %497 = vadd.xlane.f32.xlu0 %v496
        %v498 = vpop.xlane.xlu0 %497
        %v499 = vlog2.pop %v498
        %v500 = vmul.f32 %v499, 0.6931472
        %v501 = vadd.f32 %v500, %v481
        %v502 = vadd.f32 %v386, %v501
        %v503 = vmul.f32 %v502, %v334
        %v504 = vld [vmem:[#allocation3] sm:$0xff]
        %v505 = vadd.f32 %v504, %v503
        %vm506 = vcmask 7168
        %507 = vst.msk [vmem:[#allocation3] sm:$0xff] %vm506, %v505
        %p508 = scmp.eq.s32.totalorder %s33, 1
        // Predicated region
        $region49: #{tpu_custom_call.1} parent=31 // pred_check
          %p509 = pneg %p508
        $region50: #{tpu_custom_call.1} parent=31 // pred_check_branch
          %511 = sbr.rel (%p509) target = $region52
        $region51: #{tpu_custom_call.1} parent=31 // pred_region
          %v512 = vld [vmem:[#allocation3] sm:$0xff]
          %v513 = vsel %vm506, %v512, 0.0
          %514 = vadd.xlane.f32.xlu0 %v513
          %v515 = vpop.xlane.xlu0 %514
          %v516 = vrot.slane %v515, 4
          %v517 = vadd.f32 %v515, %v516
          %v518 = vrot.slane %v517, 2
          %v519 = vadd.f32 %v517, %v518
          %v520 = vrot.slane %v519, 1
          %v521 = vadd.f32 %v519, %v520
          %s522 = vtos %v521
          %v523 = vstv %s522
          %524 = vst [vmem:[%s290] sm:$0x1] %v523
        $region52: #{tpu_custom_call.1} parent=31 // pred_fallthru
          _
        %s525 = sand.u32 %s129, 1
        %s526 = scalar_lea.sflag [#allocation6], %s525
        %s527 = sand.u32 %s129, 1
        %s528 = scalar_lea.vmem [#allocation10], %s527
        %s529 = sand.u32 %s155, 1
        %s530 = scalar_lea.sflag [#allocation12], %s529
        %s531 = sand.u32 %s155, 1
        %s532 = smul.addr %s531, 4
        %s533 = scalar_lea.vmem [#allocation11], %s532
        // Predicated region
        $region53: #{tpu_custom_call.1} parent=31 // pred_check
          %p534 = pneg %p139
        $region54: #{tpu_custom_call.1} parent=31 // pred_check_branch
          %536 = sbr.rel (%p534) target = $region56
        $region55: #{tpu_custom_call.1} parent=31 // pred_region
          %s538 = ssub.s32 16, 16
          %539 = vsyncadd %s526, %s538
          %s540 = smul.addr %s32, 16
          %s541 = scalar_lea.hbm %s3, %s540
          %s543 = sshll.u32 %s528, 4
          %s544 = int_to_ptr.vmem [resolvable:$true] %s543
          %546 = dma.vmem_to_hbm [thread:$0]  %s544, 16, %s541, %s526
        $region56: #{tpu_custom_call.1} parent=31 // pred_fallthru
          _
        // Predicated region
        $region57: #{tpu_custom_call.1} parent=31 // pred_check
          %p547 = pneg %p165
        $region58: #{tpu_custom_call.1} parent=31 // pred_check_branch
          %549 = sbr.rel (%p547) target = $region60
        $region59: #{tpu_custom_call.1} parent=31 // pred_region
          %s551 = ssub.s32 64, 64
          %552 = vsyncadd %s530, %s551
          %s553 = smul.addr %s32, 4
          %s554 = smul.addr %s553, 16
          %s555 = scalar_lea.hbm %s4, %s554
          %s557 = sshll.u32 %s533, 4
          %s558 = int_to_ptr.vmem [resolvable:$true] %s557
          %560 = dma.vmem_to_hbm [thread:$0]  %s558, 64, %s555, %s530
        $region60: #{tpu_custom_call.1} parent=31 // pred_fallthru
          _
      $region32: #{tpu_custom_call.1} parent=5 // pred_fallthru
        _
      %p561 = scmp.le.s32.totalorder 2, %s23
      // Predicated region
      $region61: #{tpu_custom_call.1} parent=5 // pred_check
        %p562 = pneg %p561
      $region62: #{tpu_custom_call.1} parent=5 // pred_check_branch
        %564 = sbr.rel (%p562) target = $region64
      $region63: #{tpu_custom_call.1} parent=5 // pred_region
        %s565 = ssub.s32 %s23, 2
        // Predicated region
        $region65: #{tpu_custom_call.1} parent=63 // pred_check
          %p566 = pneg %p145
        $region66: #{tpu_custom_call.1} parent=63 // pred_check_branch
          %568 = sbr.rel (%p566) target = $region68
        $region67: #{tpu_custom_call.1} parent=63 // pred_region
          %s569 = sand.u32 %s130, 1
          %s570 = scalar_lea.sflag [#allocation6], %s569
          %s571 = sand.u32 %s130, 1
          %s572 = scalar_lea.vmem [#allocation10], %s571
          %573 = dma.done %s570, 16
        $region68: #{tpu_custom_call.1} parent=63 // pred_fallthru
          _
        // Predicated region
        $region69: #{tpu_custom_call.1} parent=63 // pred_check
          %p574 = pneg %p171
        $region70: #{tpu_custom_call.1} parent=63 // pred_check_branch
          %576 = sbr.rel (%p574) target = $region72
        $region71: #{tpu_custom_call.1} parent=63 // pred_region
          %s577 = sand.u32 %s156, 1
          %s578 = scalar_lea.sflag [#allocation12], %s577
          %s579 = sand.u32 %s156, 1
          %s580 = smul.addr %s579, 4
          %s581 = scalar_lea.vmem [#allocation11], %s580
          %582 = dma.done %s578, 64
        $region72: #{tpu_custom_call.1} parent=63 // pred_fallthru
          _
      $region64: #{tpu_custom_call.1} parent=5 // pred_fallthru
        _
    $region6: #{tpu_custom_call.1} parent=1 // loop_footer
      %s27 = sadd.s32 1, %s23
    $region7: #{tpu_custom_call.1} parent=1 // loop_footer_branch
      %22 = sbr.rel target = $region3
    $region8: #{tpu_custom_call.1} parent=1 // loop_exit
      _
    %583 = vsyncpa [#allocation5], 1
    %s584 = scalar_lea.sflag [#allocation5], 1
    %585 = vsyncpa %s584, 1
    %586 = vsyncpa [#allocation8], 1
    %s587 = scalar_lea.sflag [#allocation8], 1
    %588 = vsyncpa %s587, 1
    %589 = vsyncpa [#allocation6], 1
    %s590 = scalar_lea.sflag [#allocation6], 1
    %591 = vsyncpa %s590, 1
    %592 = vsyncpa [#allocation12], 1
    %s593 = scalar_lea.sflag [#allocation12], 1
    %594 = vsyncpa %s593, 1

</llo_original>
